<compile_context>
chip_gen: v5e
topology: v5e:2x2
jax: 0.10.0
libtpu: 0.0.40
codegen_flags: <defaults>
</compile_context>

<pallas_src>
import functools
import math

import jax
import jax.numpy as jnp
from jax.experimental import pallas as pl
from jax.experimental.pallas import tpu as pltpu

_LANE = 128
_SUBLANE = 8
_VMEM_BUDGET = 32 << 20  # scoped-VMEM target (bytes); conservative for v7x too


def _round_up(n, m):
    return ((n + m - 1) // m) * m


_ACTIVATIONS = {
    "tanh": jnp.tanh,
    "relu": lambda x: jnp.maximum(x, 0.0),
    "leaky_relu": lambda x: jnp.where(x > 0, x, 0.01 * x),
    "sigmoid": jax.nn.sigmoid,
    "gelu": jax.nn.gelu,
}


def _ffnn_kernel(x_ref, w1_ref, b1_ref, w2_ref, b2_ref, o_ref, *, act, mm_dtype):
    # x:  (TILE_B, F)     w1: (F,  Hp)   b1: (1, Hp)
    # w2: (Hp, Op)        b2: (1, Op)    o:  (TILE_B, Op)
    x = x_ref[...].astype(mm_dtype)                 # VPU cast, hidden under MXU
    h = jnp.dot(x, w1_ref[...], preferred_element_type=jnp.float32)
    h = act(h + b1_ref[...])                        # f32 bias + activation
    y = jnp.dot(h.astype(mm_dtype), w2_ref[...],
                preferred_element_type=jnp.float32)
    o_ref[...] = act(y + b2_ref[...]).astype(o_ref.dtype)


def prepare_params(w1, b1, w2, b2, *, mm_dtype=jnp.float32):
    """One-time conversion of torch-layout (out, in) weights to padded (in, out)
    kernel layout.  Hidden / output widths are zero-padded to multiples of 128
    so every matmul operand and the output store are lane-aligned."""
    h_dim, in_dim = w1.shape
    out_dim, h_dim2 = w2.shape
    assert h_dim2 == h_dim
    hp = _round_up(h_dim, _LANE)
    op = _round_up(out_dim, _LANE)

    w1_k = jnp.zeros((in_dim, hp), mm_dtype).at[:, :h_dim].set(w1.T.astype(mm_dtype))
    b1_k = jnp.zeros((1, hp), jnp.float32).at[:, :h_dim].set(b1.astype(jnp.float32))
    w2_k = jnp.zeros((hp, op), mm_dtype).at[:h_dim, :out_dim].set(w2.T.astype(mm_dtype))
    b2_k = jnp.zeros((1, op), jnp.float32).at[:, :out_dim].set(b2.astype(jnp.float32))
    return w1_k, b1_k, w2_k, b2_k


def _pick_tile_b(rows, in_dim, hp, op, x_bytes, mm_bytes):
    """Largest row tile (multiple of 8, capped at 1024) whose working set fits
    the VMEM budget alongside the resident weights."""
    weight_bytes = (in_dim * hp + hp * op) * mm_bytes + (hp + op) * 4
    # per-row cost: 2x buffered input tile + 2x buffered output tile + f32 hidden
    per_row = 2 * in_dim * x_bytes + 2 * op * 4 + hp * 4 + in_dim * mm_bytes
    avail = max(_VMEM_BUDGET - 2 * weight_bytes, 1 << 20)
    tile = max(_SUBLANE, (avail // per_row) // _SUBLANE * _SUBLANE)
    tile = min(tile, 1024, _round_up(max(rows, 1), _SUBLANE))
    return int(tile)


@functools.partial(
    jax.jit,
    static_argnames=("output_dim", "activation", "mm_dtype", "tile_b"))
def two_layer_ffnn_forward(x, w1_k, b1_k, w2_k, b2_k, *,
                           output_dim, activation="tanh",
                           mm_dtype=jnp.float32, tile_b=None):
    act = _ACTIVATIONS[activation]
    lead_shape = x.shape[:-1]
    in_dim = x.shape[-1]
    rows = int(math.prod(lead_shape)) if lead_shape else 1
    x2d = x.reshape(rows, in_dim)

    hp = w1_k.shape[1]
    op = w2_k.shape[1]
    mm_bytes = jnp.dtype(mm_dtype).itemsize
    x_bytes = jnp.dtype(x2d.dtype).itemsize

    if tile_b is None:
        tile_b = _pick_tile_b(rows, in_dim, hp, op, x_bytes, mm_bytes)
    rows_pad = _round_up(rows, tile_b)
    if rows_pad != rows:
        x2d = jnp.pad(x2d, ((0, rows_pad - rows), (0, 0)))

    grid = (rows_pad // tile_b,)

    # resident weights + double-buffered x/out tiles + f32 intermediates.
    vmem_need = ((in_dim * hp + hp * op) * mm_bytes + (hp + op) * 4
                 + 2 * tile_b * in_dim * x_bytes
                 + 2 * tile_b * op * 4
                 + 2 * tile_b * hp * 4)
    vmem_limit = int(min(max(2 * vmem_need, 4 << 20), 64 << 20))

    cost = pl.CostEstimate(
        flops=2 * rows_pad * (in_dim * hp + hp * op),
        transcendentals=(rows_pad * (hp + op)
                         if activation in ("tanh", "sigmoid", "gelu") else 0),
        bytes_accessed=(rows_pad * in_dim * x_bytes
                        + (in_dim * hp + hp * op) * mm_bytes
                        + (hp + op) * 4
                        + rows_pad * op * 4),
    )

    kernel = functools.partial(_ffnn_kernel, act=act, mm_dtype=mm_dtype)

    out = pl.pallas_call(
        kernel,
        out_shape=jax.ShapeDtypeStruct((rows_pad, op), jnp.float32),
        grid_spec=pltpu.PrefetchScalarGridSpec(
            num_scalar_prefetch=0,
            grid=grid,
            in_specs=[
                pl.BlockSpec((tile_b, in_dim), lambda i: (i, 0)),  # x tile (pipelined)
                pl.BlockSpec((in_dim, hp), lambda i: (0, 0)),      # W1 resident
                pl.BlockSpec((1, hp), lambda i: (0, 0)),           # b1 resident
                pl.BlockSpec((hp, op), lambda i: (0, 0)),          # W2 resident
                pl.BlockSpec((1, op), lambda i: (0, 0)),           # b2 resident
            ],
            out_specs=pl.BlockSpec((tile_b, op), lambda i: (i, 0)),  # lane-dense store
        ),
        compiler_params=pltpu.CompilerParams(
            dimension_semantics=("parallel",),
            vmem_limit_bytes=vmem_limit,
        ),
        cost_estimate=cost,
    )(x2d, w1_k, b1_k, w2_k, b2_k)

    out = out[:rows, :output_dim]
    return out.reshape(*lead_shape, output_dim)


def init_params(key, input_dim, hidden_dim, output_dim):
    """Deterministic init mimicking nn.Linear shapes (weight: (out, in))."""
    k1, k2, k3, k4 = jax.random.split(key, 4)

    def uinit(k, shape, fan_in):
        bound = 1.0 / math.sqrt(fan_in)
        return jax.random.uniform(k, shape, jnp.float32, -bound, bound)

    w1 = uinit(k1, (hidden_dim, input_dim), input_dim)
    b1 = uinit(k2, (hidden_dim,), input_dim)
    w2 = uinit(k3, (output_dim, hidden_dim), hidden_dim)
    b2 = uinit(k4, (output_dim,), hidden_dim)
    return w1, b1, w2, b2


def reference_forward(x, params, activation="tanh"):
    """Pure-JAX reference (torch layout)."""
    act = _ACTIVATIONS[activation]
    w1, b1, w2, b2 = params
    h = act(x.astype(jnp.float32) @ w1.T + b1)
    return act(h @ w2.T + b2)


if __name__ == "__main__":
    key = jax.random.PRNGKey(0)
    kx, kp = jax.random.split(key)

    batch, seq = 2, 8
    input_dim, hidden_dim, output_dim = 64, 32, 3
    activation = "tanh"

    x = jax.random.normal(kx, (batch, seq, input_dim), dtype=jnp.float32)
    params = init_params(kp, input_dim, hidden_dim, output_dim)
    ref = reference_forward(x, params, activation)

    # f32 MXU path (exact).
    kparams_f32 = prepare_params(*params, mm_dtype=jnp.float32)
    out_f32 = two_layer_ffnn_forward(
        x, *kparams_f32, output_dim=output_dim, activation=activation,
        mm_dtype=jnp.float32)
    out_f32 = jax.block_until_ready(out_f32)
    assert out_f32.shape == (batch, seq, output_dim)
    assert jnp.allclose(out_f32, ref, atol=1e-4, rtol=1e-4)

    # bf16-matmul-operand path (v6e/v7x MXU-native; f32 accumulation/elementwise).
    kparams_bf16 = prepare_params(*params, mm_dtype=jnp.bfloat16)
    out_bf16 = two_layer_ffnn_forward(
        x, *kparams_bf16, output_dim=output_dim, activation=activation,
        mm_dtype=jnp.bfloat16)
    out_bf16 = jax.block_until_ready(out_bf16)
    assert out_bf16.shape == (batch, seq, output_dim)
    assert jnp.allclose(out_bf16, ref, atol=5e-2, rtol=5e-2)

    print("KERNEL_OK")
</pallas_src>

<mosaic_0001>
module attributes {stable_mosaic.version = 11 : i64} {
  func.func @_ffnn_kernel(%arg0: i32, %arg1: memref<16x64xf32, #tpu.memory_space<vmem>>, %arg2: memref<64x128xf32, #tpu.memory_space<vmem>>, %arg3: memref<1x128xf32, #tpu.memory_space<vmem>>, %arg4: memref<128x128xf32, #tpu.memory_space<vmem>>, %arg5: memref<1x128xf32, #tpu.memory_space<vmem>>, %arg6: memref<16x128xf32, #tpu.memory_space<vmem>>) attributes {dimension_semantics = [#tpu.dimension_semantics<parallel>], iteration_bounds = array<i64: 1>, scalar_prefetch = 0 : i64, scratch_operands = 0 : i64, tpu.core_type = #tpu.core_type<tc>, window_params = [{transform_indices = @transform_0, window_bounds = array<i64: 16, 64>}, {pipeline_mode = #tpu.pipeline_mode<synchronous>, transform_indices = @transform_1, window_bounds = array<i64: 64, 128>}, {pipeline_mode = #tpu.pipeline_mode<synchronous>, transform_indices = @transform_2, window_bounds = array<i64: 1, 128>}, {pipeline_mode = #tpu.pipeline_mode<synchronous>, transform_indices = @transform_3, window_bounds = array<i64: 128, 128>}, {pipeline_mode = #tpu.pipeline_mode<synchronous>, transform_indices = @transform_4, window_bounds = array<i64: 1, 128>}, {transform_indices = @transform_5, window_bounds = array<i64: 16, 128>}]} {
    %c0 = arith.constant 0 : index
    %c0_0 = arith.constant 0 : index
    %0 = vector.load %arg1[%c0, %c0_0] : memref<16x64xf32, #tpu.memory_space<vmem>>, vector<16x64xf32>
    %c0_1 = arith.constant 0 : index
    %c0_2 = arith.constant 0 : index
    %1 = vector.load %arg2[%c0_1, %c0_2] : memref<64x128xf32, #tpu.memory_space<vmem>>, vector<64x128xf32>
    %cst = arith.constant dense<0.000000e+00> : vector<16x128xf32>
    %2 = tpu.matmul %0, %1, %cst {dimension_numbers = #tpu.dot_dimension_numbers<[1], [0], [0], [1], [0, 0, 1, 1], [], []>} : vector<16x64xf32>, vector<64x128xf32>, vector<16x128xf32> -> vector<16x128xf32>
    %c0_3 = arith.constant 0 : index
    %c0_4 = arith.constant 0 : index
    %3 = vector.load %arg3[%c0_3, %c0_4] : memref<1x128xf32, #tpu.memory_space<vmem>>, vector<1x128xf32>
    %4 = vector.broadcast %3 : vector<1x128xf32> to vector<16x128xf32>
    %5 = arith.addf %2, %4 : vector<16x128xf32>
    %6 = math.tanh %5 : vector<16x128xf32>
    %c0_5 = arith.constant 0 : index
    %c0_6 = arith.constant 0 : index
    %7 = vector.load %arg4[%c0_5, %c0_6] : memref<128x128xf32, #tpu.memory_space<vmem>>, vector<128x128xf32>
    %cst_7 = arith.constant dense<0.000000e+00> : vector<16x128xf32>
    %8 = tpu.matmul %6, %7, %cst_7 {dimension_numbers = #tpu.dot_dimension_numbers<[1], [0], [0], [1], [0, 0, 1, 1], [], []>} : vector<16x128xf32>, vector<128x128xf32>, vector<16x128xf32> -> vector<16x128xf32>
    %c0_8 = arith.constant 0 : index
    %c0_9 = arith.constant 0 : index
    %9 = vector.load %arg5[%c0_8, %c0_9] : memref<1x128xf32, #tpu.memory_space<vmem>>, vector<1x128xf32>
    %10 = vector.broadcast %9 : vector<1x128xf32> to vector<16x128xf32>
    %11 = arith.addf %8, %10 : vector<16x128xf32>
    %12 = math.tanh %11 : vector<16x128xf32>
    %c0_10 = arith.constant 0 : index
    %c0_11 = arith.constant 0 : index
    %13 = vector.load %arg6[%c0_10, %c0_11] : memref<16x128xf32, #tpu.memory_space<vmem>>, vector<16x128xf32>
    tpu.vector_store %arg6[%c0_10, %c0_11], %12 {strides = array<i32>} : memref<16x128xf32, #tpu.memory_space<vmem>>, vector<16x128xf32>,
    return
  }
  func.func @transform_0(%arg0: i32) -> (i32, i32) {
    %c0_i32 = arith.constant 0 : i32
    %c0_i32_0 = arith.constant 0 : i32
    return %arg0, %c0_i32 : i32, i32
  }
  func.func @transform_1(%arg0: i32) -> (i32, i32) {
    %c0_i32 = arith.constant 0 : i32
    %c0_i32_0 = arith.constant 0 : i32
    %c0_i32_1 = arith.constant 0 : i32
    return %c0_i32, %c0_i32_0 : i32, i32
  }
  func.func @transform_2(%arg0: i32) -> (i32, i32) {
    %c0_i32 = arith.constant 0 : i32
    %c0_i32_0 = arith.constant 0 : i32
    %c0_i32_1 = arith.constant 0 : i32
    return %c0_i32, %c0_i32_0 : i32, i32
  }
  func.func @transform_3(%arg0: i32) -> (i32, i32) {
    %c0_i32 = arith.constant 0 : i32
    %c0_i32_0 = arith.constant 0 : i32
    %c0_i32_1 = arith.constant 0 : i32
    return %c0_i32, %c0_i32_0 : i32, i32
  }
  func.func @transform_4(%arg0: i32) -> (i32, i32) {
    %c0_i32 = arith.constant 0 : i32
    %c0_i32_0 = arith.constant 0 : i32
    %c0_i32_1 = arith.constant 0 : i32
    return %c0_i32, %c0_i32_0 : i32, i32
  }
  func.func @transform_5(%arg0: i32) -> (i32, i32) {
    %c0_i32 = arith.constant 0 : i32
    %c0_i32_0 = arith.constant 0 : i32
    return %arg0, %c0_i32 : i32, i32
  }
}

</mosaic_0001>

<llo_original>
// kernel: two_layer_ffnn_forward.1
$region0: #{two_layer_ffnn_forward.1}
  #allocation0 [shape = 'u32[]', space=smem, size = 0x4, offset = 0x4, fixed_abs, tag = 'smem constant byte address 0x4 - core index']
  #allocation1 [shape = 'u32[72,128]{1,0:T(1,128)}', space=vmem, size = 0x9000, scoped, tag = 'internal scratch']
  %s0 = inlined_call_operand.hbm [shape: f32[16,64], index: 0, kind: input, shape index: {}]
  %s1 = inlined_call_operand.hbm [shape: f32[64,128], index: 1, kind: input, shape index: {}]
  %s2 = inlined_call_operand.vmem [shape: f32[1,128], index: 2, kind: input, shape index: {}]
  %s3 = inlined_call_operand.hbm [shape: f32[128,128], index: 3, kind: input, shape index: {}]
  %s4 = inlined_call_operand.vmem [shape: f32[1,128], index: 4, kind: input, shape index: {}]
  %s5 = inlined_call_operand.vmem [shape: f32[16,128], index: 5, kind: output, shape index: {}]
  %s6 = sld [smem:[#allocation0]]
  $region42: #{two_layer_ffnn_forward.1} parent=0
    _
  %s8 = ssub.s32 1, %s6
  %s9 = scalar_select 0, %s8, %s6
  $region1: #{two_layer_ffnn_forward.1} parent=0
    #allocation2 [shape = 'u8[8192]{0}', space=vmem, size = 0x2000, scoped, tag = 'input window, operand 0, single buffered']
    #allocation3 [shape = 's32[1]{0}', space=sflag, size = 0x4, scoped, tag = 'scoped memory for two_layer_ffnn_forward.1']
    #allocation4 [shape = 'u8[32768]{0}', space=vmem, size = 0x8000, scoped, tag = 'input window, operand 1, single buffered']
    #allocation5 [shape = 's32[1]{0}', space=sflag, size = 0x4, scoped, tag = 'scoped memory for two_layer_ffnn_forward.1']
    #allocation6 [shape = 'u8[65536]{0}', space=vmem, size = 0x10000, scoped, tag = 'input window, operand 3, single buffered']
    %10 = vsyncpa [#allocation3], 0
    %11 = vsyncpa [#allocation5], 0
    // Predicated region
    $region2: #{two_layer_ffnn_forward.1} parent=1 // pred_check
      _
    $region3: #{two_layer_ffnn_forward.1} parent=1 // pred_check_branch
      %13 = sbr.rel (0) target = $region5
    $region4: #{two_layer_ffnn_forward.1} parent=1 // pred_region
      %15 = vsyncadd [#allocation3], 0
      %s16 = sshll.u32 %s0, 4
      %s17 = int_to_ptr.hbm [resolvable:$true] %s16
      %s18 = sshll.u32 [#allocation2], 4
      %s19 = int_to_ptr.vmem [resolvable:$true] %s18
      %24 = dma.hbm_to_vmem [thread:$0]  %s17, 256, %s19, [#allocation3], 128, 128, 8
    $region5: #{two_layer_ffnn_forward.1} parent=1 // pred_fallthru
      _
    // Predicated region
    $region6: #{two_layer_ffnn_forward.1} parent=1 // pred_check
      _
    $region7: #{two_layer_ffnn_forward.1} parent=1 // pred_check_branch
      %26 = sbr.rel (0) target = $region9
    $region8: #{two_layer_ffnn_forward.1} parent=1 // pred_region
      %28 = vsyncadd [#allocation5], 0
      %s29 = sshll.u32 %s1, 4
      %s30 = int_to_ptr.hbm [resolvable:$true] %s29
      %s31 = sshll.u32 [#allocation4], 4
      %s32 = int_to_ptr.vmem [resolvable:$true] %s31
      %37 = dma.hbm_to_vmem [thread:$0]  %s30, 1024, %s32, [#allocation5], 128, 128, 8
    $region9: #{two_layer_ffnn_forward.1} parent=1 // pred_fallthru
      _
    // Predicated region
    $region10: #{two_layer_ffnn_forward.1} parent=1 // pred_check
      _
    $region11: #{two_layer_ffnn_forward.1} parent=1 // pred_check_branch
      %39 = sbr.rel (0) target = $region13
    $region12: #{two_layer_ffnn_forward.1} parent=1 // pred_region
      _
    $region13: #{two_layer_ffnn_forward.1} parent=1 // pred_fallthru
      _
    // Predicated region
    $region14: #{two_layer_ffnn_forward.1} parent=1 // pred_check
      _
    $region15: #{two_layer_ffnn_forward.1} parent=1 // pred_check_branch
      %41 = sbr.rel (0) target = $region17
    $region16: #{two_layer_ffnn_forward.1} parent=1 // pred_region
      %43 = vsyncadd [#allocation5], 0
      %s44 = sshll.u32 %s3, 4
      %s45 = int_to_ptr.hbm [resolvable:$true] %s44
      %s46 = sshll.u32 [#allocation6], 4
      %s47 = int_to_ptr.vmem [resolvable:$true] %s46
      %52 = dma.hbm_to_vmem [thread:$0]  %s45, 2048, %s47, [#allocation5], 128, 128, 8
    $region17: #{two_layer_ffnn_forward.1} parent=1 // pred_fallthru
      _
    // Predicated region
    $region18: #{two_layer_ffnn_forward.1} parent=1 // pred_check
      _
    $region19: #{two_layer_ffnn_forward.1} parent=1 // pred_check_branch
      %54 = sbr.rel (0) target = $region21
    $region20: #{two_layer_ffnn_forward.1} parent=1 // pred_region
      _
    $region21: #{two_layer_ffnn_forward.1} parent=1 // pred_fallthru
      _
    // Predicated region
    $region22: #{two_layer_ffnn_forward.1} parent=1 // pred_check
      _
    $region23: #{two_layer_ffnn_forward.1} parent=1 // pred_check_branch
      %56 = sbr.rel (0) target = $region25
    $region24: #{two_layer_ffnn_forward.1} parent=1 // pred_region
      %58 = dma.done [#allocation3], 256
    $region25: #{two_layer_ffnn_forward.1} parent=1 // pred_fallthru
      _
    // Predicated region
    $region26: #{two_layer_ffnn_forward.1} parent=1 // pred_check
      _
    $region27: #{two_layer_ffnn_forward.1} parent=1 // pred_check_branch
      %60 = sbr.rel (0) target = $region29
    $region28: #{two_layer_ffnn_forward.1} parent=1 // pred_region
      %62 = dma.done [#allocation5], 1024
    $region29: #{two_layer_ffnn_forward.1} parent=1 // pred_fallthru
      _
    // Predicated region
    $region30: #{two_layer_ffnn_forward.1} parent=1 // pred_check
      _
    $region31: #{two_layer_ffnn_forward.1} parent=1 // pred_check_branch
      %64 = sbr.rel (0) target = $region33
    $region32: #{two_layer_ffnn_forward.1} parent=1 // pred_region
      %66 = dma.done [#allocation5], 2048
    $region33: #{two_layer_ffnn_forward.1} parent=1 // pred_fallthru
      _
    %v67 = vld [vmem:[#allocation2] sm:$0xff]
    %v68 = vld [vmem:[#allocation2 + $0x8] sm:$0xff]
    %v69 = vld [vmem:[#allocation4] sm:$0xff]
    %v70 = vld [vmem:[#allocation4 + $0x8] sm:$0xff]
    %v71 = vld [vmem:[#allocation4 + $0x10] sm:$0xff]
    %v72 = vld [vmem:[#allocation4 + $0x18] sm:$0xff]
    %v73 = vld [vmem:[#allocation4 + $0x20] sm:$0xff]
    %v74 = vld [vmem:[#allocation4 + $0x28] sm:$0xff]
    %v75 = vld [vmem:[#allocation4 + $0x30] sm:$0xff]
    %v76 = vld [vmem:[#allocation4 + $0x38] sm:$0xff]
    %v77 = vld [vmem:[%s2] sm:$0x1]
    %v79 = vperm.slane %v77, 0
    %vm81 = vcmask 523264
    %v83 = vsel %vm81, %v67, 0
    %v86 = vsel %vm81, %v68, 0
    %88 = vmatpush.msra.mxu0 0.0
    %89 = vmatpush.msra.mxu0 0.0
    %90 = vmatpush.msra.mxu0 0.0
    %91 = vmatpush.msra.mxu0 0.0
    %92 = vmatpush.msra.mxu0 0.0
    %93 = vmatpush.msra.mxu0 0.0
    %94 = vmatpush.msra.mxu0 0.0
    %95 = vmatpush.msra.mxu0 0.0
    %96 = vmatpush.msra.mxu0 %v76
    %97 = vmatpush.msra.mxu0 %v75
    %98 = vmatpush.msra.mxu0 %v74
    %99 = vmatpush.msra.mxu0 %v73
    %100 = vmatpush.msra.mxu0 %v72
    %101 = vmatpush.msra.mxu0 %v71
    %102 = vmatpush.msra.mxu0 %v70
    %103 = vmatpush.msra.mxu0 %v69
    %104 = vmatmul.f32.gmra.mxu0 %v83
    %v105 = vpop.f32.mrf.mxu0
    %v106 = vadd.f32 %v79, %v105
    %107 = vmatmul.f32.gmra.mxu0 %v86
    %v108 = vpop.f32.mrf.mxu0
    %v109 = vadd.f32 %v79, %v108
    %110 = vdwg.mxu0
    %v111 = vtanh.pop %v106
    %v112 = vtanh.pop %v109
    %v113 = vld [vmem:[#allocation6] sm:$0xff]
    %v114 = vld [vmem:[#allocation6 + $0x8] sm:$0xff]
    %v115 = vld [vmem:[#allocation6 + $0x10] sm:$0xff]
    %v116 = vld [vmem:[#allocation6 + $0x18] sm:$0xff]
    %v117 = vld [vmem:[#allocation6 + $0x20] sm:$0xff]
    %v118 = vld [vmem:[#allocation6 + $0x28] sm:$0xff]
    %v119 = vld [vmem:[#allocation6 + $0x30] sm:$0xff]
    %v120 = vld [vmem:[#allocation6 + $0x38] sm:$0xff]
    %v121 = vld [vmem:[#allocation6 + $0x40] sm:$0xff]
    %v122 = vld [vmem:[#allocation6 + $0x48] sm:$0xff]
    %v123 = vld [vmem:[#allocation6 + $0x50] sm:$0xff]
    %v124 = vld [vmem:[#allocation6 + $0x58] sm:$0xff]
    %v125 = vld [vmem:[#allocation6 + $0x60] sm:$0xff]
    %v126 = vld [vmem:[#allocation6 + $0x68] sm:$0xff]
    %v127 = vld [vmem:[#allocation6 + $0x70] sm:$0xff]
    %v128 = vld [vmem:[#allocation6 + $0x78] sm:$0xff]
    %v129 = vld [vmem:[%s4] sm:$0x1]
    %v131 = vperm.slane %v129, 0
    %133 = vmatpush.msra.mxu0 %v128
    %134 = vmatpush.msra.mxu0 %v127
    %135 = vmatpush.msra.mxu0 %v126
    %136 = vmatpush.msra.mxu0 %v125
    %137 = vmatpush.msra.mxu0 %v124
    %138 = vmatpush.msra.mxu0 %v123
    %139 = vmatpush.msra.mxu0 %v122
    %140 = vmatpush.msra.mxu0 %v121
    %141 = vmatpush.msra.mxu0 %v120
    %142 = vmatpush.msra.mxu0 %v119
    %143 = vmatpush.msra.mxu0 %v118
    %144 = vmatpush.msra.mxu0 %v117
    %145 = vmatpush.msra.mxu0 %v116
    %146 = vmatpush.msra.mxu0 %v115
    %147 = vmatpush.msra.mxu0 %v114
    %148 = vmatpush.msra.mxu0 %v113
    %149 = vmatmul.f32.gmra.mxu0 %v111
    %v150 = vpop.f32.mrf.mxu0
    %v151 = vadd.f32 %v131, %v150
    %152 = vmatmul.f32.gmra.mxu0 %v112
    %v153 = vpop.f32.mrf.mxu0
    %v154 = vadd.f32 %v131, %v153
    %155 = vdwg.mxu0
    %v156 = vtanh.pop %v151
    %v157 = vtanh.pop %v154
    %158 = vst [vmem:[%s5] sm:$0xff] %v156
    %159 = vst [vmem:[%s5 + $0x8] sm:$0xff] %v157
    // Predicated region
    $region34: #{two_layer_ffnn_forward.1} parent=1 // pred_check
      _
    $region35: #{two_layer_ffnn_forward.1} parent=1 // pred_check_branch
      %161 = sbr.rel (0) target = $region37
    $region36: #{two_layer_ffnn_forward.1} parent=1 // pred_region
      _
    $region37: #{two_layer_ffnn_forward.1} parent=1 // pred_fallthru
      _
    // Predicated region
    $region38: #{two_layer_ffnn_forward.1} parent=1 // pred_check
      _
    $region39: #{two_layer_ffnn_forward.1} parent=1 // pred_check_branch
      %163 = sbr.rel (0) target = $region41
    $region40: #{two_layer_ffnn_forward.1} parent=1 // pred_region
      _
    $region41: #{two_layer_ffnn_forward.1} parent=1 // pred_fallthru
      _
    %164 = vsyncpa [#allocation3], 1
    %165 = vsyncpa [#allocation5], 1

</llo_original>
